<compile_context>
chip_gen: v7x
topology: tpu7x:2x2x1
jax: 0.10.0
libtpu: 0.0.40
codegen_flags: <defaults>
</compile_context>

<pallas_src>
import jax
import jax.numpy as jnp
from jax.experimental import pallas as pl
from jax.experimental.pallas import tpu as pltpu

EPS = 1e-5  # PyTorch LayerNorm default eps


def _layernorm(x, g, b):
    mu = jnp.mean(x, axis=-1, keepdims=True)
    var = jnp.mean((x - mu) ** 2, axis=-1, keepdims=True)
    return (x - mu) * jax.lax.rsqrt(var + EPS) * g + b


def transformer_kernel(x_ref, wstack_ref, w1b_ref, vec_ref, out_ref):
    BS, D = x_ref.shape
    B = out_ref.shape[0]
    S = BS // B
    FFN = w1b_ref.shape[1]
    f32 = jnp.float32

    # --- static slices of the packed weight blocks (offsets are multiples of 8)
    wpos = wstack_ref[0 * D:1 * D, :]
    wq   = wstack_ref[1 * D:2 * D, :]
    wk   = wstack_ref[2 * D:3 * D, :]
    wv   = wstack_ref[3 * D:4 * D, :]
    wo   = wstack_ref[4 * D:5 * D, :]
    w2   = wstack_ref[5 * D:5 * D + FFN, :]
    w1   = w1b_ref[0:D, :]
    b1   = w1b_ref[D:D + 1, :]

    vec = vec_ref[...]                                   # (12, D) small vectors
    bpos, bq, bk, bv, bo = (vec[i:i + 1, :] for i in range(5))
    g1, be1, b2, g2, be2 = (vec[i:i + 1, :] for i in range(5, 10))
    wfc = vec[10:11, :]
    bfc = vec[11:12, 0:1]

    x = x_ref[...]                                       # (B*S, D)

    # pos_encoder (Linear D->D)
    h = jnp.dot(x, wpos, preferred_element_type=f32) + bpos          # (B*S, D)

    # K / V projections for every position (needed by attention).
    k = jnp.dot(h, wk, preferred_element_type=f32) + bk              # (B*S, D)
    v = jnp.dot(h, wv, preferred_element_type=f32) + bv              # (B*S, D)

    # Register-level regrouping only (S == sublane tile size).
    h3 = h.reshape(B, S, D)
    k3 = k.reshape(B, S, D)
    v3 = v.reshape(B, S, D)

    # Only the last position feeds fc_out (valid because num_layers == 1),
    # so Q / out_proj / LayerNorm / FFN are computed for position S-1 only.
    h_last = h3[:, S - 1, :]                                          # (B, D)
    scale = 1.0 / (float(D) ** 0.5)
    q = (jnp.dot(h_last, wq, preferred_element_type=f32) + bq) * scale

    # Attention on the VPU: scores via lane reduce, weighted sum via sublane
    # reduce (M=1 per batch -> MXU einsums would only add transposes/drain).
    s = jnp.sum(k3 * q[:, None, :], axis=-1, keepdims=True)          # (B, S, 1)
    s = s - jnp.max(s, axis=1, keepdims=True)
    p = jnp.exp(s)
    p = p / jnp.sum(p, axis=1, keepdims=True)                        # exact div
    attn = jnp.sum(p * v3, axis=1)                                    # (B, D)

    # out_proj + residual + LayerNorm 1.
    # TODO(synk): dropout layers (p=0.1) are modeled as identity (eval mode).
    attn = jnp.dot(attn, wo, preferred_element_type=f32) + bo
    h1 = _layernorm(h_last + attn, g1, be1)                           # (B, D)

    # feed-forward: Linear(D->FFN) -> ReLU -> Linear(FFN->D), residual, LN 2.
    f = jnp.maximum(jnp.dot(h1, w1, preferred_element_type=f32) + b1, 0.0)
    f = jnp.dot(f, w2, preferred_element_type=f32) + b2
    h2 = _layernorm(h1 + f, g2, be2)                                  # (B, D)

    # fc_out: elementwise multiply + lane reduce (no 1-lane-output matmul).
    y = jnp.sum(h2 * wfc, axis=-1, keepdims=True) + bfc               # (B, 1)
    out_ref[...] = y.astype(out_ref.dtype)


def prepare_params(params):
    """One-time host-side weight prep, hoisted OUT of the per-call path.

    Transposes PyTorch-layout (Dout, Din) weights to (Din, Dout) and packs all
    20 tensors into 3 buffers:
      wstack : (5*D + FFN, D)  = wpos | wq | wk | wv | wo | w2
      w1b    : (D + 1, FFN)    = w1 rows, b1 as last row
      vec    : (12, D)         = bpos,bq,bk,bv,bo,g1,be1,b2,g2,be2,wfc,[bfc,0..]
    """
    (wpos, bpos, wq, bq, wk, bk, wv, bv, wo, bo,
     g1, be1, w1, b1, w2, b2, g2, be2, wfc, bfc) = params
    D = wpos.shape[0]
    FFN = w1.shape[0]

    wstack = jnp.concatenate([wpos.T, wq.T, wk.T, wv.T, wo.T, w2.T], axis=0)
    w1b = jnp.concatenate([w1.T, b1.reshape(1, FFN)], axis=0)
    rows = [bpos, bq, bk, bv, bo, g1, be1, b2, g2, be2, wfc.reshape(D)]
    vec = jnp.stack([r.reshape(D) for r in rows]
                    + [jnp.pad(bfc.reshape(1), (0, D - 1))], axis=0)
    return (wstack.astype(jnp.float32),
            w1b.astype(jnp.float32),
            vec.astype(jnp.float32))


@jax.jit
def transformer_forward(x, wstack, w1b, vec):
    B, S, D = x.shape
    FFN = w1b.shape[1]
    x2 = x.reshape(B * S, D)             # contiguous batch-first flatten (free)

    flops = (2 * B * S * D * D * 3            # pos / K / V projections
             + 2 * B * D * D * 2              # Q and out_proj (last token only)
             + 2 * B * D * FFN * 2            # FFN
             + 6 * B * S * D)                 # attention (VPU)
    bytes_accessed = 4 * (x2.size + wstack.size + w1b.size + vec.size + B)

    vmem = pltpu.MemorySpace.VMEM
    return pl.pallas_call(
        transformer_kernel,
        out_shape=jax.ShapeDtypeStruct((B, 1), jnp.float32),
        in_specs=[pl.BlockSpec(memory_space=vmem)] * 4,
        out_specs=pl.BlockSpec(memory_space=vmem),
        cost_estimate=pl.CostEstimate(
            flops=flops,
            transcendentals=B * S + 4 * B,
            bytes_accessed=bytes_accessed),
    )(x2, wstack, w1b, vec)


def init_params(key, d_model, ffn_hid):
    """Parameters in PyTorch layout: weights (Dout, Din), biases (Dout,)."""
    ks = jax.random.split(key, 16)

    def w(k, shape, scale=0.1):
        return jax.random.normal(k, shape, jnp.float32) * scale

    wpos = w(ks[0], (d_model, d_model)); bpos = w(ks[1], (d_model,))
    wq = w(ks[2], (d_model, d_model));   bq = w(ks[3], (d_model,))
    wk = w(ks[4], (d_model, d_model));   bk = w(ks[5], (d_model,))
    wv = w(ks[6], (d_model, d_model));   bv = w(ks[7], (d_model,))
    wo = w(ks[8], (d_model, d_model));   bo = w(ks[9], (d_model,))
    g1 = jnp.ones((d_model,), jnp.float32)
    be1 = jnp.zeros((d_model,), jnp.float32)
    w1 = w(ks[10], (ffn_hid, d_model));  b1 = w(ks[11], (ffn_hid,))
    w2 = w(ks[12], (d_model, ffn_hid));  b2 = w(ks[13], (d_model,))
    g2 = jnp.ones((d_model,), jnp.float32)
    be2 = jnp.zeros((d_model,), jnp.float32)
    wfc = w(ks[14], (1, d_model));       bfc = w(ks[15], (1,))
    return (wpos, bpos, wq, bq, wk, bk, wv, bv, wo, bo,
            g1, be1, w1, b1, w2, b2, g2, be2, wfc, bfc)


if __name__ == "__main__":
    # Shapes consistent with the module: batch=2, seq=8, input_dim=32,
    # num_layers=1, num_heads=1, ffn_hid_dim=128.
    B, S, D, FFN = 2, 8, 32, 128
    key = jax.random.PRNGKey(0)
    kx, kp = jax.random.split(key)
    x = jax.random.normal(kx, (B, S, D), jnp.float32)
    params = init_params(kp, D, FFN)

    # One-time weight prep, cached outside the per-call jitted path.
    packed = jax.block_until_ready(prepare_params(params))
    wstack, w1b, vec = packed

    out = transformer_forward(x, wstack, w1b, vec)
    out = jax.block_until_ready(out)
    assert out.shape == (B, 1) and out.dtype == jnp.float32
    print("KERNEL_OK")
</pallas_src>

<mosaic_0001>
module attributes {stable_mosaic.version = 11 : i64} {
  func.func @transformer_kernel(%arg0: memref<16x32xf32, #tpu.memory_space<vmem>>, %arg1: memref<288x32xf32, #tpu.memory_space<vmem>>, %arg2: memref<33x128xf32, #tpu.memory_space<vmem>>, %arg3: memref<12x32xf32, #tpu.memory_space<vmem>>, %arg4: memref<2x1xf32, #tpu.memory_space<vmem>>) attributes {dimension_semantics = [], scalar_prefetch = 0 : i64, scratch_operands = 0 : i64, tpu.core_type = #tpu.core_type<tc>} {
    %c0 = arith.constant 0 : index
    %c0_0 = arith.constant 0 : index
    %0 = vector.load %arg1[%c0, %c0_0] : memref<288x32xf32, #tpu.memory_space<vmem>>, vector<32x32xf32>
    %c32 = arith.constant 32 : index
    %c0_1 = arith.constant 0 : index
    %1 = vector.load %arg1[%c32, %c0_1] : memref<288x32xf32, #tpu.memory_space<vmem>>, vector<32x32xf32>
    %c64 = arith.constant 64 : index
    %c0_2 = arith.constant 0 : index
    %2 = vector.load %arg1[%c64, %c0_2] : memref<288x32xf32, #tpu.memory_space<vmem>>, vector<32x32xf32>
    %c96 = arith.constant 96 : index
    %c0_3 = arith.constant 0 : index
    %3 = vector.load %arg1[%c96, %c0_3] : memref<288x32xf32, #tpu.memory_space<vmem>>, vector<32x32xf32>
    %c128 = arith.constant 128 : index
    %c0_4 = arith.constant 0 : index
    %4 = vector.load %arg1[%c128, %c0_4] : memref<288x32xf32, #tpu.memory_space<vmem>>, vector<32x32xf32>
    %c160 = arith.constant 160 : index
    %c0_5 = arith.constant 0 : index
    %5 = vector.load %arg1[%c160, %c0_5] : memref<288x32xf32, #tpu.memory_space<vmem>>, vector<128x32xf32>
    %c0_6 = arith.constant 0 : index
    %c0_7 = arith.constant 0 : index
    %6 = vector.load %arg2[%c0_6, %c0_7] : memref<33x128xf32, #tpu.memory_space<vmem>>, vector<32x128xf32>
    %c32_8 = arith.constant 32 : index
    %c0_9 = arith.constant 0 : index
    %7 = vector.load %arg2[%c32_8, %c0_9] : memref<33x128xf32, #tpu.memory_space<vmem>>, vector<1x128xf32>
    %c0_10 = arith.constant 0 : index
    %c0_11 = arith.constant 0 : index
    %8 = vector.load %arg3[%c0_10, %c0_11] : memref<12x32xf32, #tpu.memory_space<vmem>>, vector<12x32xf32>
    %9 = vector.extract_strided_slice %8 {offsets = [0, 0], sizes = [1, 32], strides = [1, 1]} : vector<12x32xf32> to vector<1x32xf32>
    %10 = vector.extract_strided_slice %8 {offsets = [1, 0], sizes = [1, 32], strides = [1, 1]} : vector<12x32xf32> to vector<1x32xf32>
    %11 = vector.extract_strided_slice %8 {offsets = [2, 0], sizes = [1, 32], strides = [1, 1]} : vector<12x32xf32> to vector<1x32xf32>
    %12 = vector.extract_strided_slice %8 {offsets = [3, 0], sizes = [1, 32], strides = [1, 1]} : vector<12x32xf32> to vector<1x32xf32>
    %13 = vector.extract_strided_slice %8 {offsets = [4, 0], sizes = [1, 32], strides = [1, 1]} : vector<12x32xf32> to vector<1x32xf32>
    %14 = vector.extract_strided_slice %8 {offsets = [5, 0], sizes = [1, 32], strides = [1, 1]} : vector<12x32xf32> to vector<1x32xf32>
    %15 = vector.extract_strided_slice %8 {offsets = [6, 0], sizes = [1, 32], strides = [1, 1]} : vector<12x32xf32> to vector<1x32xf32>
    %16 = vector.extract_strided_slice %8 {offsets = [7, 0], sizes = [1, 32], strides = [1, 1]} : vector<12x32xf32> to vector<1x32xf32>
    %17 = vector.extract_strided_slice %8 {offsets = [8, 0], sizes = [1, 32], strides = [1, 1]} : vector<12x32xf32> to vector<1x32xf32>
    %18 = vector.extract_strided_slice %8 {offsets = [9, 0], sizes = [1, 32], strides = [1, 1]} : vector<12x32xf32> to vector<1x32xf32>
    %19 = vector.extract_strided_slice %8 {offsets = [10, 0], sizes = [1, 32], strides = [1, 1]} : vector<12x32xf32> to vector<1x32xf32>
    %20 = vector.extract_strided_slice %8 {offsets = [11, 0], sizes = [1, 1], strides = [1, 1]} : vector<12x32xf32> to vector<1x1xf32>
    %c0_12 = arith.constant 0 : index
    %c0_13 = arith.constant 0 : index
    %21 = vector.load %arg0[%c0_12, %c0_13] : memref<16x32xf32, #tpu.memory_space<vmem>>, vector<16x32xf32>
    %cst = arith.constant dense<0.000000e+00> : vector<16x32xf32>
    %22 = tpu.matmul %21, %0, %cst {dimension_numbers = #tpu.dot_dimension_numbers<[1], [0], [0], [1], [0, 0, 1, 1], [], []>} : vector<16x32xf32>, vector<32x32xf32>, vector<16x32xf32> -> vector<16x32xf32>
    %23 = vector.broadcast %9 : vector<1x32xf32> to vector<16x32xf32>
    %24 = arith.addf %22, %23 : vector<16x32xf32>
    %cst_14 = arith.constant dense<0.000000e+00> : vector<16x32xf32>
    %25 = tpu.matmul %24, %2, %cst_14 {dimension_numbers = #tpu.dot_dimension_numbers<[1], [0], [0], [1], [0, 0, 1, 1], [], []>} : vector<16x32xf32>, vector<32x32xf32>, vector<16x32xf32> -> vector<16x32xf32>
    %26 = vector.broadcast %11 : vector<1x32xf32> to vector<16x32xf32>
    %27 = arith.addf %25, %26 : vector<16x32xf32>
    %cst_15 = arith.constant dense<0.000000e+00> : vector<16x32xf32>
    %28 = tpu.matmul %24, %3, %cst_15 {dimension_numbers = #tpu.dot_dimension_numbers<[1], [0], [0], [1], [0, 0, 1, 1], [], []>} : vector<16x32xf32>, vector<32x32xf32>, vector<16x32xf32> -> vector<16x32xf32>
    %29 = vector.broadcast %12 : vector<1x32xf32> to vector<16x32xf32>
    %30 = arith.addf %28, %29 : vector<16x32xf32>
    %31 = vector.shape_cast %24 : vector<16x32xf32> to vector<2x8x32xf32>
    %32 = vector.shape_cast %27 : vector<16x32xf32> to vector<2x8x32xf32>
    %33 = vector.shape_cast %30 : vector<16x32xf32> to vector<2x8x32xf32>
    %34 = vector.extract_strided_slice %31 {offsets = [0, 7, 0], sizes = [2, 1, 32], strides = [1, 1, 1]} : vector<2x8x32xf32> to vector<2x1x32xf32>
    %35 = vector.shape_cast %34 : vector<2x1x32xf32> to vector<2x32xf32>
    %cst_16 = arith.constant dense<0.000000e+00> : vector<2x32xf32>
    %36 = tpu.matmul %35, %1, %cst_16 {dimension_numbers = #tpu.dot_dimension_numbers<[1], [0], [0], [1], [0, 0, 1, 1], [], []>} : vector<2x32xf32>, vector<32x32xf32>, vector<2x32xf32> -> vector<2x32xf32>
    %37 = vector.broadcast %10 : vector<1x32xf32> to vector<2x32xf32>
    %38 = arith.addf %36, %37 : vector<2x32xf32>
    %cst_17 = arith.constant 0.176776692 : f32
    %39 = vector.broadcast %cst_17 : f32 to vector<2x32xf32>
    %40 = arith.mulf %38, %39 : vector<2x32xf32>
    %41 = vector.shape_cast %40 : vector<2x32xf32> to vector<2x1x32xf32>
    %42 = vector.broadcast %41 : vector<2x1x32xf32> to vector<2x8x32xf32>
    %43 = arith.mulf %32, %42 : vector<2x8x32xf32>
    %cst_18 = arith.constant dense<0.000000e+00> : vector<2x8xf32>
    %44 = vector.multi_reduction <add>, %43, %cst_18 [2] : vector<2x8x32xf32> to vector<2x8xf32>
    %45 = vector.shape_cast %44 : vector<2x8xf32> to vector<2x8x1xf32>
    %cst_19 = arith.constant dense<0xFF800000> : vector<2x1xf32>
    %46 = vector.multi_reduction <maximumf>, %45, %cst_19 [1] : vector<2x8x1xf32> to vector<2x1xf32>
    %47 = vector.shape_cast %46 : vector<2x1xf32> to vector<2x1x1xf32>
    %48 = vector.broadcast %47 : vector<2x1x1xf32> to vector<2x8x1xf32>
    %49 = arith.subf %45, %48 : vector<2x8x1xf32>
    %50 = math.exp %49 : vector<2x8x1xf32>
    %cst_20 = arith.constant dense<0.000000e+00> : vector<2x1xf32>
    %51 = vector.multi_reduction <add>, %50, %cst_20 [1] : vector<2x8x1xf32> to vector<2x1xf32>
    %52 = vector.shape_cast %51 : vector<2x1xf32> to vector<2x1x1xf32>
    %53 = vector.broadcast %52 : vector<2x1x1xf32> to vector<2x8x1xf32>
    %54 = arith.divf %50, %53 : vector<2x8x1xf32>
    %55 = vector.broadcast %54 : vector<2x8x1xf32> to vector<2x8x32xf32>
    %56 = arith.mulf %55, %33 : vector<2x8x32xf32>
    %cst_21 = arith.constant dense<0.000000e+00> : vector<2x32xf32>
    %57 = vector.multi_reduction <add>, %56, %cst_21 [1] : vector<2x8x32xf32> to vector<2x32xf32>
    %cst_22 = arith.constant dense<0.000000e+00> : vector<2x32xf32>
    %58 = tpu.matmul %57, %4, %cst_22 {dimension_numbers = #tpu.dot_dimension_numbers<[1], [0], [0], [1], [0, 0, 1, 1], [], []>} : vector<2x32xf32>, vector<32x32xf32>, vector<2x32xf32> -> vector<2x32xf32>
    %59 = vector.broadcast %13 : vector<1x32xf32> to vector<2x32xf32>
    %60 = arith.addf %58, %59 : vector<2x32xf32>
    %61 = arith.addf %35, %60 : vector<2x32xf32>
    %cst_23 = arith.constant dense<0.000000e+00> : vector<2xf32>
    %62 = vector.multi_reduction <add>, %61, %cst_23 [1] : vector<2x32xf32> to vector<2xf32>
    %63 = vector.shape_cast %62 : vector<2xf32> to vector<2x1xf32>
    %cst_24 = arith.constant 3.200000e+01 : f32
    %64 = vector.broadcast %cst_24 : f32 to vector<2x1xf32>
    %65 = arith.divf %63, %64 : vector<2x1xf32>
    %66 = vector.broadcast %65 : vector<2x1xf32> to vector<2x32xf32>
    %67 = arith.subf %61, %66 : vector<2x32xf32>
    %68 = arith.mulf %67, %67 : vector<2x32xf32>
    %cst_25 = arith.constant dense<0.000000e+00> : vector<2xf32>
    %69 = vector.multi_reduction <add>, %68, %cst_25 [1] : vector<2x32xf32> to vector<2xf32>
    %70 = vector.shape_cast %69 : vector<2xf32> to vector<2x1xf32>
    %cst_26 = arith.constant 3.200000e+01 : f32
    %71 = vector.broadcast %cst_26 : f32 to vector<2x1xf32>
    %72 = arith.divf %70, %71 : vector<2x1xf32>
    %73 = vector.broadcast %65 : vector<2x1xf32> to vector<2x32xf32>
    %74 = arith.subf %61, %73 : vector<2x32xf32>
    %cst_27 = arith.constant 9.99999974E-6 : f32
    %75 = vector.broadcast %cst_27 : f32 to vector<2x1xf32>
    %76 = arith.addf %72, %75 : vector<2x1xf32>
    %77 = math.rsqrt %76 : vector<2x1xf32>
    %78 = vector.broadcast %77 : vector<2x1xf32> to vector<2x32xf32>
    %79 = arith.mulf %74, %78 : vector<2x32xf32>
    %80 = vector.broadcast %14 : vector<1x32xf32> to vector<2x32xf32>
    %81 = arith.mulf %79, %80 : vector<2x32xf32>
    %82 = vector.broadcast %15 : vector<1x32xf32> to vector<2x32xf32>
    %83 = arith.addf %81, %82 : vector<2x32xf32>
    %cst_28 = arith.constant dense<0.000000e+00> : vector<2x128xf32>
    %84 = tpu.matmul %83, %6, %cst_28 {dimension_numbers = #tpu.dot_dimension_numbers<[1], [0], [0], [1], [0, 0, 1, 1], [], []>} : vector<2x32xf32>, vector<32x128xf32>, vector<2x128xf32> -> vector<2x128xf32>
    %85 = vector.broadcast %7 : vector<1x128xf32> to vector<2x128xf32>
    %86 = arith.addf %84, %85 : vector<2x128xf32>
    %cst_29 = arith.constant 0.000000e+00 : f32
    %87 = vector.broadcast %cst_29 : f32 to vector<2x128xf32>
    %88 = arith.maximumf %86, %87 : vector<2x128xf32>
    %cst_30 = arith.constant dense<0.000000e+00> : vector<2x32xf32>
    %89 = tpu.matmul %88, %5, %cst_30 {dimension_numbers = #tpu.dot_dimension_numbers<[1], [0], [0], [1], [0, 0, 1, 1], [], []>} : vector<2x128xf32>, vector<128x32xf32>, vector<2x32xf32> -> vector<2x32xf32>
    %90 = vector.broadcast %16 : vector<1x32xf32> to vector<2x32xf32>
    %91 = arith.addf %89, %90 : vector<2x32xf32>
    %92 = arith.addf %83, %91 : vector<2x32xf32>
    %cst_31 = arith.constant dense<0.000000e+00> : vector<2xf32>
    %93 = vector.multi_reduction <add>, %92, %cst_31 [1] : vector<2x32xf32> to vector<2xf32>
    %94 = vector.shape_cast %93 : vector<2xf32> to vector<2x1xf32>
    %cst_32 = arith.constant 3.200000e+01 : f32
    %95 = vector.broadcast %cst_32 : f32 to vector<2x1xf32>
    %96 = arith.divf %94, %95 : vector<2x1xf32>
    %97 = vector.broadcast %96 : vector<2x1xf32> to vector<2x32xf32>
    %98 = arith.subf %92, %97 : vector<2x32xf32>
    %99 = arith.mulf %98, %98 : vector<2x32xf32>
    %cst_33 = arith.constant dense<0.000000e+00> : vector<2xf32>
    %100 = vector.multi_reduction <add>, %99, %cst_33 [1] : vector<2x32xf32> to vector<2xf32>
    %101 = vector.shape_cast %100 : vector<2xf32> to vector<2x1xf32>
    %cst_34 = arith.constant 3.200000e+01 : f32
    %102 = vector.broadcast %cst_34 : f32 to vector<2x1xf32>
    %103 = arith.divf %101, %102 : vector<2x1xf32>
    %104 = vector.broadcast %96 : vector<2x1xf32> to vector<2x32xf32>
    %105 = arith.subf %92, %104 : vector<2x32xf32>
    %cst_35 = arith.constant 9.99999974E-6 : f32
    %106 = vector.broadcast %cst_35 : f32 to vector<2x1xf32>
    %107 = arith.addf %103, %106 : vector<2x1xf32>
    %108 = math.rsqrt %107 : vector<2x1xf32>
    %109 = vector.broadcast %108 : vector<2x1xf32> to vector<2x32xf32>
    %110 = arith.mulf %105, %109 : vector<2x32xf32>
    %111 = vector.broadcast %17 : vector<1x32xf32> to vector<2x32xf32>
    %112 = arith.mulf %110, %111 : vector<2x32xf32>
    %113 = vector.broadcast %18 : vector<1x32xf32> to vector<2x32xf32>
    %114 = arith.addf %112, %113 : vector<2x32xf32>
    %115 = vector.broadcast %19 : vector<1x32xf32> to vector<2x32xf32>
    %116 = arith.mulf %114, %115 : vector<2x32xf32>
    %cst_36 = arith.constant dense<0.000000e+00> : vector<2xf32>
    %117 = vector.multi_reduction <add>, %116, %cst_36 [1] : vector<2x32xf32> to vector<2xf32>
    %118 = vector.shape_cast %117 : vector<2xf32> to vector<2x1xf32>
    %119 = vector.broadcast %20 : vector<1x1xf32> to vector<2x1xf32>
    %120 = arith.addf %118, %119 : vector<2x1xf32>
    %c0_37 = arith.constant 0 : index
    %c0_38 = arith.constant 0 : index
    %121 = vector.load %arg4[%c0_37, %c0_38] : memref<2x1xf32, #tpu.memory_space<vmem>>, vector<2x1xf32>
    tpu.vector_store %arg4[%c0_37, %c0_38], %120 {strides = array<i32>} : memref<2x1xf32, #tpu.memory_space<vmem>>, vector<2x1xf32>,
    return
  }
}

</mosaic_0001>

<llo_original>
// kernel: transformer_forward.1
$region0: #{transformer_forward.1}
  #allocation0 [shape = 'u32[]', space=smem, size = 0x4, offset = 0x4, fixed_abs, tag = 'smem constant byte address 0x4 - core index']
  #allocation1 [shape = 'u32[144,128]{1,0:T(1,128)}', space=vmem, size = 0x12000, scoped, tag = 'internal scratch']
  %s0 = inlined_call_operand.vmem [shape: f32[16,32], index: 0, kind: input, shape index: {}]
  %s1 = inlined_call_operand.vmem [shape: f32[288,32], index: 1, kind: input, shape index: {}]
  %s2 = inlined_call_operand.vmem [shape: f32[33,128], index: 2, kind: input, shape index: {}]
  %s3 = inlined_call_operand.vmem [shape: f32[12,32], index: 3, kind: input, shape index: {}]
  %s4 = inlined_call_operand.vmem [shape: f32[2,1], index: 4, kind: output, shape index: {}]
  %s5 = sld [smem:[#allocation0]]
  $region26: #{transformer_forward.1} parent=0
    _
  %s7 = ssub.s32 1, %s5
  %s8 = scalar_select 0, %s7, %s5
  // Predicated region
  $region2: #{transformer_forward.1} parent=0 // pred_check
    _
  $region3: #{transformer_forward.1} parent=0 // pred_check_branch
    %10 = sbr.rel (0) target = $region5
  $region4: #{transformer_forward.1} parent=0 // pred_region
    _
  $region5: #{transformer_forward.1} parent=0 // pred_fallthru
    _
  // Predicated region
  $region6: #{transformer_forward.1} parent=0 // pred_check
    _
  $region7: #{transformer_forward.1} parent=0 // pred_check_branch
    %12 = sbr.rel (0) target = $region9
  $region8: #{transformer_forward.1} parent=0 // pred_region
    _
  $region9: #{transformer_forward.1} parent=0 // pred_fallthru
    _
  // Predicated region
  $region10: #{transformer_forward.1} parent=0 // pred_check
    _
  $region11: #{transformer_forward.1} parent=0 // pred_check_branch
    %14 = sbr.rel (0) target = $region13
  $region12: #{transformer_forward.1} parent=0 // pred_region
    _
  $region13: #{transformer_forward.1} parent=0 // pred_fallthru
    _
  // Predicated region
  $region14: #{transformer_forward.1} parent=0 // pred_check
    _
  $region15: #{transformer_forward.1} parent=0 // pred_check_branch
    %16 = sbr.rel (0) target = $region17
  $region16: #{transformer_forward.1} parent=0 // pred_region
    _
  $region17: #{transformer_forward.1} parent=0 // pred_fallthru
    _
  %v17 = vld [vmem:[%s1] sm:$0xff]
  %v18 = vld [vmem:[%s1 + $0x8] sm:$0xff]
  %v19 = vld [vmem:[%s1 + $0x10] sm:$0xff]
  %v20 = vld [vmem:[%s1 + $0x18] sm:$0xff]
  %v21 = vld [vmem:[%s1 + $0x20] sm:$0xff]
  %v22 = vld [vmem:[%s1 + $0x28] sm:$0xff]
  %v23 = vld [vmem:[%s1 + $0x30] sm:$0xff]
  %v24 = vld [vmem:[%s1 + $0x38] sm:$0xff]
  %v25 = vld [vmem:[%s1 + $0x40] sm:$0xff]
  %v26 = vld [vmem:[%s1 + $0x48] sm:$0xff]
  %v27 = vld [vmem:[%s1 + $0x50] sm:$0xff]
  %v28 = vld [vmem:[%s1 + $0x58] sm:$0xff]
  %v29 = vld [vmem:[%s1 + $0x60] sm:$0xff]
  %v30 = vld [vmem:[%s1 + $0x68] sm:$0xff]
  %v31 = vld [vmem:[%s1 + $0x70] sm:$0xff]
  %v32 = vld [vmem:[%s1 + $0x78] sm:$0xff]
  %v33 = vld [vmem:[%s1 + $0x80] sm:$0xff]
  %v34 = vld [vmem:[%s1 + $0x88] sm:$0xff]
  %v35 = vld [vmem:[%s1 + $0x90] sm:$0xff]
  %v36 = vld [vmem:[%s1 + $0x98] sm:$0xff]
  %v37 = vld [vmem:[%s1 + $0xa0] sm:$0xff]
  %v38 = vld [vmem:[%s1 + $0xa8] sm:$0xff]
  %v39 = vld [vmem:[%s1 + $0xb0] sm:$0xff]
  %v40 = vld [vmem:[%s1 + $0xb8] sm:$0xff]
  %v41 = vld [vmem:[%s1 + $0xc0] sm:$0xff]
  %v42 = vld [vmem:[%s1 + $0xc8] sm:$0xff]
  %v43 = vld [vmem:[%s1 + $0xd0] sm:$0xff]
  %v44 = vld [vmem:[%s1 + $0xd8] sm:$0xff]
  %v45 = vld [vmem:[%s1 + $0xe0] sm:$0xff]
  %v46 = vld [vmem:[%s1 + $0xe8] sm:$0xff]
  %v47 = vld [vmem:[%s1 + $0xf0] sm:$0xff]
  %v48 = vld [vmem:[%s1 + $0xf8] sm:$0xff]
  %v49 = vld [vmem:[%s1 + $0x100] sm:$0xff]
  %v50 = vld [vmem:[%s1 + $0x108] sm:$0xff]
  %v51 = vld [vmem:[%s1 + $0x110] sm:$0xff]
  %v52 = vld [vmem:[%s1 + $0x118] sm:$0xff]
  %v53 = vld [vmem:[%s2] sm:$0xff]
  %v54 = vld [vmem:[%s2 + $0x8] sm:$0xff]
  %v55 = vld [vmem:[%s2 + $0x10] sm:$0xff]
  %v56 = vld [vmem:[%s2 + $0x18] sm:$0xff]
  %v57 = vld [vmem:[%s2 + $0x20] sm:$0x1]
  %v58 = vld [vmem:[%s3] sm:$0xff]
  %v59 = vld [vmem:[%s3 + $0x8] sm:$0xf]
  %v60 = vld [vmem:[%s0] sm:$0xff]
  %v61 = vld [vmem:[%s0 + $0x8] sm:$0xff]
  %v62 = vlaneseq
  %v63 = vshrl.u32 %v62, 7
  %v64 = vsub.s32 0, %v63
  %v65 = vrot.slane %v58, %v64
  %vm66 = vcmask 261120
  %v68 = vsel %vm66, %v60, 0
  %v71 = vsel %vm66, %v61, 0
  %73 = vmatprep.subr.mxu0 0.0
  %74 = vmatpush1.msra.mxu0 %v17
  %75 = vmatprep.subr.mxu0 0.0
  %76 = vmatpush1.msra.mxu0 %v18
  %77 = vmatprep.subr.mxu0 0.0
  %78 = vmatpush1.msra.mxu0 %v19
  %79 = vmatprep.subr.mxu0 0.0
  %80 = vmatpush1.msra.mxu0 %v20
  %81 = vmatprep.subr.mxu0 0.0
  %82 = vmatpush1.msra.mxu0 0.0
  %83 = vmatprep.subr.mxu0 0.0
  %84 = vmatpush1.msra.mxu0 0.0
  %85 = vmatprep.subr.mxu0 0.0
  %86 = vmatpush1.msra.mxu0 0.0
  %87 = vmatprep.subr.mxu0 0.0
  %88 = vmatpush1.msra.mxu0 0.0
  %89 = vmatprep.subr.mxu0 0.0
  %90 = vmatpush1.msra.mxu0 0.0
  %91 = vmatprep.subr.mxu0 0.0
  %92 = vmatpush1.msra.mxu0 0.0
  %93 = vmatprep.subr.mxu0 0.0
  %94 = vmatpush1.msra.mxu0 0.0
  %95 = vmatprep.subr.mxu0 0.0
  %96 = vmatpush1.msra.mxu0 0.0
  %97 = vmatprep.subr.mxu0 0.0
  %98 = vmatpush1.msra.mxu0 0.0
  %99 = vmatprep.subr.mxu0 0.0
  %100 = vmatpush1.msra.mxu0 0.0
  %101 = vmatprep.subr.mxu0 0.0
  %102 = vmatpush1.msra.mxu0 0.0
  %103 = vmatprep.subr.mxu0 0.0
  %104 = vmatpush1.msra.mxu0 0.0
  %105 = vmatprep.subr.mxu0 0.0
  %106 = vmatpush1.msra.mxu0 0.0
  %107 = vmatprep.subr.mxu0 0.0
  %108 = vmatpush1.msra.mxu0 0.0
  %109 = vmatprep.subr.mxu0 0.0
  %110 = vmatpush1.msra.mxu0 0.0
  %111 = vmatprep.subr.mxu0 0.0
  %112 = vmatpush1.msra.mxu0 0.0
  %113 = vmatprep.subr.mxu0 0.0
  %114 = vmatpush1.msra.mxu0 0.0
  %115 = vmatprep.subr.mxu0 0.0
  %116 = vmatpush1.msra.mxu0 0.0
  %117 = vmatprep.subr.mxu0 0.0
  %118 = vmatpush1.msra.mxu0 0.0
  %119 = vmatprep.subr.mxu0 0.0
  %120 = vmatpush1.msra.mxu0 0.0
  %121 = vmatprep.subr.mxu0 0.0
  %122 = vmatpush1.msra.mxu0 0.0
  %123 = vmatprep.subr.mxu0 0.0
  %124 = vmatpush1.msra.mxu0 0.0
  %125 = vmatprep.subr.mxu0 0.0
  %126 = vmatpush1.msra.mxu0 0.0
  %127 = vmatprep.subr.mxu0 0.0
  %128 = vmatpush1.msra.mxu0 0.0
  %129 = vmatprep.subr.mxu0 0.0
  %130 = vmatpush1.msra.mxu0 0.0
  %131 = vmatprep.subr.mxu0 0.0
  %132 = vmatpush1.msra.mxu0 0.0
  %133 = vmatprep.subr.mxu0 0.0
  %134 = vmatpush1.msra.mxu0 0.0
  %135 = vmatprep.subr.mxu0 0.0
  %136 = vmatpush1.msra.mxu0 0.0
  %137 = vmatprep.mubr.f32.mxu0 0.0
  %138 = vmatmul.mubr.f32.gmra.mrb[0].mxu0 %v68
  %v139 = vpop.f32.mrb[0].mxu0
  %v140 = vadd.f32 %v65, %v139
  %v141 = vpop.f32.mrb[0].mxu0
  %142 = vmatprep.mubr.f32.mxu0 0.0
  %143 = vmatmul.mubr.f32.gmra.mrb[0].mxu0 %v71
  %v144 = vpop.f32.mrb[0].mxu0
  %v145 = vadd.f32 %v65, %v144
  %v146 = vpop.f32.mrb[0].mxu0
  %147 = vdwg.mxu0
  %v148 = vlaneseq
  %v149 = vshrl.u32 %v148, 7
  %v150 = vsub.s32 2, %v149
  %v151 = vrot.slane %v58, %v150
  %v153 = vsel %vm66, %v140, 0
  %v156 = vsel %vm66, %v145, 0
  %158 = vmatprep.subr.mxu0 0.0
  %159 = vmatpush1.msra.mxu0 %v25
  %160 = vmatprep.subr.mxu0 0.0
  %161 = vmatpush1.msra.mxu0 %v26
  %162 = vmatprep.subr.mxu0 0.0
  %163 = vmatpush1.msra.mxu0 %v27
  %164 = vmatprep.subr.mxu0 0.0
  %165 = vmatpush1.msra.mxu0 %v28
  %166 = vmatprep.subr.mxu0 0.0
  %167 = vmatpush1.msra.mxu0 0.0
  %168 = vmatprep.subr.mxu0 0.0
  %169 = vmatpush1.msra.mxu0 0.0
  %170 = vmatprep.subr.mxu0 0.0
  %171 = vmatpush1.msra.mxu0 0.0
  %172 = vmatprep.subr.mxu0 0.0
  %173 = vmatpush1.msra.mxu0 0.0
  %174 = vmatprep.subr.mxu0 0.0
  %175 = vmatpush1.msra.mxu0 0.0
  %176 = vmatprep.subr.mxu0 0.0
  %177 = vmatpush1.msra.mxu0 0.0
  %178 = vmatprep.subr.mxu0 0.0
  %179 = vmatpush1.msra.mxu0 0.0
  %180 = vmatprep.subr.mxu0 0.0
  %181 = vmatpush1.msra.mxu0 0.0
  %182 = vmatprep.subr.mxu0 0.0
  %183 = vmatpush1.msra.mxu0 0.0
  %184 = vmatprep.subr.mxu0 0.0
  %185 = vmatpush1.msra.mxu0 0.0
  %186 = vmatprep.subr.mxu0 0.0
  %187 = vmatpush1.msra.mxu0 0.0
  %188 = vmatprep.subr.mxu0 0.0
  %189 = vmatpush1.msra.mxu0 0.0
  %190 = vmatprep.subr.mxu0 0.0
  %191 = vmatpush1.msra.mxu0 0.0
  %192 = vmatprep.subr.mxu0 0.0
  %193 = vmatpush1.msra.mxu0 0.0
  %194 = vmatprep.subr.mxu0 0.0
  %195 = vmatpush1.msra.mxu0 0.0
  %196 = vmatprep.subr.mxu0 0.0
  %197 = vmatpush1.msra.mxu0 0.0
  %198 = vmatprep.subr.mxu0 0.0
  %199 = vmatpush1.msra.mxu0 0.0
  %200 = vmatprep.subr.mxu0 0.0
  %201 = vmatpush1.msra.mxu0 0.0
  %202 = vmatprep.subr.mxu0 0.0
  %203 = vmatpush1.msra.mxu0 0.0
  %204 = vmatprep.subr.mxu0 0.0
  %205 = vmatpush1.msra.mxu0 0.0
  %206 = vmatprep.subr.mxu0 0.0
  %207 = vmatpush1.msra.mxu0 0.0
  %208 = vmatprep.subr.mxu0 0.0
  %209 = vmatpush1.msra.mxu0 0.0
  %210 = vmatprep.subr.mxu0 0.0
  %211 = vmatpush1.msra.mxu0 0.0
  %212 = vmatprep.subr.mxu0 0.0
  %213 = vmatpush1.msra.mxu0 0.0
  %214 = vmatprep.subr.mxu0 0.0
  %215 = vmatpush1.msra.mxu0 0.0
  %216 = vmatprep.subr.mxu0 0.0
  %217 = vmatpush1.msra.mxu0 0.0
  %218 = vmatprep.subr.mxu0 0.0
  %219 = vmatpush1.msra.mxu0 0.0
  %220 = vmatprep.subr.mxu0 0.0
  %221 = vmatpush1.msra.mxu0 0.0
  %222 = vmatprep.mubr.f32.mxu0 0.0
  %223 = vmatmul.mubr.f32.gmra.mrb[0].mxu0 %v153
  %v224 = vpop.f32.mrb[0].mxu0
  %v225 = vadd.f32 %v151, %v224
  %v226 = vpop.f32.mrb[0].mxu0
  %227 = vmatprep.mubr.f32.mxu0 0.0
  %228 = vmatmul.mubr.f32.gmra.mrb[0].mxu0 %v156
  %v229 = vpop.f32.mrb[0].mxu0
  %v230 = vadd.f32 %v151, %v229
  %v231 = vpop.f32.mrb[0].mxu0
  %232 = vdwg.mxu0
  %v233 = vlaneseq
  %v234 = vshrl.u32 %v233, 7
  %v235 = vsub.s32 3, %v234
  %v236 = vrot.slane %v58, %v235
  %237 = vmatprep.subr.mxu0 0.0
  %238 = vmatpush1.msra.mxu0 %v29
  %239 = vmatprep.subr.mxu0 0.0
  %240 = vmatpush1.msra.mxu0 %v30
  %241 = vmatprep.subr.mxu0 0.0
  %242 = vmatpush1.msra.mxu0 %v31
  %243 = vmatprep.subr.mxu0 0.0
  %244 = vmatpush1.msra.mxu0 %v32
  %245 = vmatprep.subr.mxu0 0.0
  %246 = vmatpush1.msra.mxu0 0.0
  %247 = vmatprep.subr.mxu0 0.0
  %248 = vmatpush1.msra.mxu0 0.0
  %249 = vmatprep.subr.mxu0 0.0
  %250 = vmatpush1.msra.mxu0 0.0
  %251 = vmatprep.subr.mxu0 0.0
  %252 = vmatpush1.msra.mxu0 0.0
  %253 = vmatprep.subr.mxu0 0.0
  %254 = vmatpush1.msra.mxu0 0.0
  %255 = vmatprep.subr.mxu0 0.0
  %256 = vmatpush1.msra.mxu0 0.0
  %257 = vmatprep.subr.mxu0 0.0
  %258 = vmatpush1.msra.mxu0 0.0
  %259 = vmatprep.subr.mxu0 0.0
  %260 = vmatpush1.msra.mxu0 0.0
  %261 = vmatprep.subr.mxu0 0.0
  %262 = vmatpush1.msra.mxu0 0.0
  %263 = vmatprep.subr.mxu0 0.0
  %264 = vmatpush1.msra.mxu0 0.0
  %265 = vmatprep.subr.mxu0 0.0
  %266 = vmatpush1.msra.mxu0 0.0
  %267 = vmatprep.subr.mxu0 0.0
  %268 = vmatpush1.msra.mxu0 0.0
  %269 = vmatprep.subr.mxu0 0.0
  %270 = vmatpush1.msra.mxu0 0.0
  %271 = vmatprep.subr.mxu0 0.0
  %272 = vmatpush1.msra.mxu0 0.0
  %273 = vmatprep.subr.mxu0 0.0
  %274 = vmatpush1.msra.mxu0 0.0
  %275 = vmatprep.subr.mxu0 0.0
  %276 = vmatpush1.msra.mxu0 0.0
  %277 = vmatprep.subr.mxu0 0.0
  %278 = vmatpush1.msra.mxu0 0.0
  %279 = vmatprep.subr.mxu0 0.0
  %280 = vmatpush1.msra.mxu0 0.0
  %281 = vmatprep.subr.mxu0 0.0
  %282 = vmatpush1.msra.mxu0 0.0
  %283 = vmatprep.subr.mxu0 0.0
  %284 = vmatpush1.msra.mxu0 0.0
  %285 = vmatprep.subr.mxu0 0.0
  %286 = vmatpush1.msra.mxu0 0.0
  %287 = vmatprep.subr.mxu0 0.0
  %288 = vmatpush1.msra.mxu0 0.0
  %289 = vmatprep.subr.mxu0 0.0
  %290 = vmatpush1.msra.mxu0 0.0
  %291 = vmatprep.subr.mxu0 0.0
  %292 = vmatpush1.msra.mxu0 0.0
  %293 = vmatprep.subr.mxu0 0.0
  %294 = vmatpush1.msra.mxu0 0.0
  %295 = vmatprep.subr.mxu0 0.0
  %296 = vmatpush1.msra.mxu0 0.0
  %297 = vmatprep.subr.mxu0 0.0
  %298 = vmatpush1.msra.mxu0 0.0
  %299 = vmatprep.subr.mxu0 0.0
  %300 = vmatpush1.msra.mxu0 0.0
  %301 = vmatprep.mubr.f32.mxu0 0.0
  %302 = vmatmul.mubr.f32.gmra.mrb[0].mxu0 %v153
  %v303 = vpop.f32.mrb[0].mxu0
  %v304 = vadd.f32 %v236, %v303
  %v305 = vpop.f32.mrb[0].mxu0
  %306 = vmatprep.mubr.f32.mxu0 0.0
  %307 = vmatmul.mubr.f32.gmra.mrb[0].mxu0 %v156
  %v308 = vpop.f32.mrb[0].mxu0
  %v309 = vadd.f32 %v236, %v308
  %v310 = vpop.f32.mrb[0].mxu0
  %311 = vdwg.mxu0
  %v312 = vlaneseq
  %v313 = vshrl.u32 %v312, 7
  %v314 = vsub.s32 1, %v313
  %v315 = vrot.slane %v58, %v314
  %v316 = vrot.slane %v140, 7
  %v317 = vrot.slane %v145, 6
  %vm318 = vcmask 1041409
  %v319 = vsel %vm318, %v317, %v316
  %v320 = vsel %vm66, %v319, 0
  %322 = vmatprep.subr.mxu0 0.0
  %323 = vmatpush1.msra.mxu0 %v21
  %324 = vmatprep.subr.mxu0 0.0
  %325 = vmatpush1.msra.mxu0 %v22
  %326 = vmatprep.subr.mxu0 0.0
  %327 = vmatpush1.msra.mxu0 %v23
  %328 = vmatprep.subr.mxu0 0.0
  %329 = vmatpush1.msra.mxu0 %v24
  %330 = vmatprep.subr.mxu0 0.0
  %331 = vmatpush1.msra.mxu0 0.0
  %332 = vmatprep.subr.mxu0 0.0
  %333 = vmatpush1.msra.mxu0 0.0
  %334 = vmatprep.subr.mxu0 0.0
  %335 = vmatpush1.msra.mxu0 0.0
  %336 = vmatprep.subr.mxu0 0.0
  %337 = vmatpush1.msra.mxu0 0.0
  %338 = vmatprep.subr.mxu0 0.0
  %339 = vmatpush1.msra.mxu0 0.0
  %340 = vmatprep.subr.mxu0 0.0
  %341 = vmatpush1.msra.mxu0 0.0
  %342 = vmatprep.subr.mxu0 0.0
  %343 = vmatpush1.msra.mxu0 0.0
  %344 = vmatprep.subr.mxu0 0.0
  %345 = vmatpush1.msra.mxu0 0.0
  %346 = vmatprep.subr.mxu0 0.0
  %347 = vmatpush1.msra.mxu0 0.0
  %348 = vmatprep.subr.mxu0 0.0
  %349 = vmatpush1.msra.mxu0 0.0
  %350 = vmatprep.subr.mxu0 0.0
  %351 = vmatpush1.msra.mxu0 0.0
  %352 = vmatprep.subr.mxu0 0.0
  %353 = vmatpush1.msra.mxu0 0.0
  %354 = vmatprep.subr.mxu0 0.0
  %355 = vmatpush1.msra.mxu0 0.0
  %356 = vmatprep.subr.mxu0 0.0
  %357 = vmatpush1.msra.mxu0 0.0
  %358 = vmatprep.subr.mxu0 0.0
  %359 = vmatpush1.msra.mxu0 0.0
  %360 = vmatprep.subr.mxu0 0.0
  %361 = vmatpush1.msra.mxu0 0.0
  %362 = vmatprep.subr.mxu0 0.0
  %363 = vmatpush1.msra.mxu0 0.0
  %364 = vmatprep.subr.mxu0 0.0
  %365 = vmatpush1.msra.mxu0 0.0
  %366 = vmatprep.subr.mxu0 0.0
  %367 = vmatpush1.msra.mxu0 0.0
  %368 = vmatprep.subr.mxu0 0.0
  %369 = vmatpush1.msra.mxu0 0.0
  %370 = vmatprep.subr.mxu0 0.0
  %371 = vmatpush1.msra.mxu0 0.0
  %372 = vmatprep.subr.mxu0 0.0
  %373 = vmatpush1.msra.mxu0 0.0
  %374 = vmatprep.subr.mxu0 0.0
  %375 = vmatpush1.msra.mxu0 0.0
  %376 = vmatprep.subr.mxu0 0.0
  %377 = vmatpush1.msra.mxu0 0.0
  %378 = vmatprep.subr.mxu0 0.0
  %379 = vmatpush1.msra.mxu0 0.0
  %380 = vmatprep.subr.mxu0 0.0
  %381 = vmatpush1.msra.mxu0 0.0
  %382 = vmatprep.subr.mxu0 0.0
  %383 = vmatpush1.msra.mxu0 0.0
  %384 = vmatprep.subr.mxu0 0.0
  %385 = vmatpush1.msra.mxu0 0.0
  %386 = vmatprep.mubr.f32.mxu0 0.0
  %387 = vmatmul.mubr.f32.gmra.mrb[0].mxu0 %v320
  %v388 = vpop.f32.mrb[0].mxu0
  %v389 = vadd.f32 %v315, %v388
  %v390 = vpop.f32.mrb[0].mxu0
  %391 = vdwg.mxu0
  %v392 = vmul.f32 %v389, 0.17677669
  %v395 = vunpack.c.l.s4 1966171168
  %v396 = vunpack.c.0.s8 %v395
  %v397 = vlaneseq
  %v398 = vshrl.u32 %v397, 7
  %v399 = vsub.s32 %v396, %v398
  %v400 = vrot.slane %v392, %v399
  %v401 = vcombine.high %v400, %v400
  %v403 = vunpack.c.l.s4 1966171168
  %v404 = vunpack.c.0.s8 %v403
  %v405 = vlaneseq
  %v406 = vshrl.u32 %v405, 7
  %v407 = vsub.s32 %v404, %v406
  %v408 = vrot.slane %v400, %v407
  %v410 = vunpack.c.l.s4 1966171168
  %v411 = vunpack.c.0.s8 %v410
  %v412 = vlaneseq
  %v413 = vshrl.u32 %v412, 7
  %v414 = vsub.s32 %v411, %v413
  %v415 = vrot.slane %v401, %v414
  %v416 = vlaneseq
  %v417 = vshrl.u32 %v416, 7
  %v418 = vsub.s32 0, %v417
  %v419 = vrot.slane %v408, %v418
  %v420 = vlaneseq
  %v421 = vshrl.u32 %v420, 7
  %v422 = vsub.s32 0, %v421
  %v423 = vrot.slane %v415, %v422
  %v426 = vmul.f32 %v225, %v419
  %v427 = vmul.f32 %v230, %v423
  %v428 = vsel %vm66, %v426, 0.0
  %429 = vadd.xlane.f32.xlu0 %v428
  %v430 = vpop.xlane.xlu0 %429
  %v431 = vsel %vm66, %v427, 0.0
  %432 = vadd.xlane.f32.xlu0 %v431
  %v433 = vpop.xlane.xlu0 %432
  %v434 = vrot.slane %v430, 4
  %v435 = vmax.f32 %v430, %v434
  %v436 = vrot.slane %v435, 2
  %v437 = vmax.f32 %v435, %v436
  %v438 = vrot.slane %v437, 1
  %v439 = vmax.f32 %v437, %v438
  %v440 = vrot.slane %v433, 4
  %v441 = vmax.f32 %v433, %v440
  %v442 = vrot.slane %v441, 2
  %v443 = vmax.f32 %v441, %v442
  %v444 = vrot.slane %v443, 1
  %v445 = vmax.f32 %v443, %v444
  %v446 = vsub.f32 %v430, %v439
  %v447 = vsub.f32 %v433, %v445
  %v448 = vmul.f32 %v446, 1.442695
  %v449 = vpow.pop %v448
  %v450 = vmul.f32 %v447, 1.442695
  %v451 = vpow.pop %v450
  %v452 = vrot.slane %v449, 4
  %v453 = vadd.f32 %v449, %v452
  %v454 = vrot.slane %v453, 2
  %v455 = vadd.f32 %v453, %v454
  %v456 = vrot.slane %v455, 1
  %v457 = vadd.f32 %v455, %v456
  %v458 = vrot.slane %v451, 4
  %v459 = vadd.f32 %v451, %v458
  %v460 = vrot.slane %v459, 2
  %v461 = vadd.f32 %v459, %v460
  %v462 = vrot.slane %v461, 1
  %v463 = vadd.f32 %v461, %v462
  %v464 = vrcp.pop %v457
  %v465 = vmul.f32 %v449, %v464
  %v466 = vrcp.pop %v463
  %v467 = vmul.f32 %v451, %v466
  %v468 = vmul.f32 %v465, %v304
  %v469 = vmul.f32 %v467, %v309
  %v470 = vsel %vm66, %v468, 0.0
  %v471 = vrot.slane %v470, 4
  %v472 = vadd.f32 %v470, %v471
  %v473 = vrot.slane %v472, 2
  %v474 = vadd.f32 %v472, %v473
  %v475 = vrot.slane %v474, 1
  %v476 = vadd.f32 %v474, %v475
  %v477 = vsel %vm66, %v469, 0.0
  %v478 = vrot.slane %v477, 4
  %v479 = vadd.f32 %v477, %v478
  %v480 = vrot.slane %v479, 2
  %v481 = vadd.f32 %v479, %v480
  %v482 = vrot.slane %v481, 1
  %v483 = vadd.f32 %v481, %v482
  %v484 = vlaneseq
  %v485 = vshrl.u32 %v484, 7
  %v486 = vsub.s32 4, %v485
  %v487 = vrot.slane %v58, %v486
  %v490 = vsel %vm318, %v483, %v476
  %v491 = vsel %vm66, %v490, 0
  %493 = vmatprep.subr.mxu0 0.0
  %494 = vmatpush1.msra.mxu0 %v33
  %495 = vmatprep.subr.mxu0 0.0
  %496 = vmatpush1.msra.mxu0 %v34
  %497 = vmatprep.subr.mxu0 0.0
  %498 = vmatpush1.msra.mxu0 %v35
  %499 = vmatprep.subr.mxu0 0.0
  %500 = vmatpush1.msra.mxu0 %v36
  %501 = vmatprep.subr.mxu0 0.0
  %502 = vmatpush1.msra.mxu0 0.0
  %503 = vmatprep.subr.mxu0 0.0
  %504 = vmatpush1.msra.mxu0 0.0
  %505 = vmatprep.subr.mxu0 0.0
  %506 = vmatpush1.msra.mxu0 0.0
  %507 = vmatprep.subr.mxu0 0.0
  %508 = vmatpush1.msra.mxu0 0.0
  %509 = vmatprep.subr.mxu0 0.0
  %510 = vmatpush1.msra.mxu0 0.0
  %511 = vmatprep.subr.mxu0 0.0
  %512 = vmatpush1.msra.mxu0 0.0
  %513 = vmatprep.subr.mxu0 0.0
  %514 = vmatpush1.msra.mxu0 0.0
  %515 = vmatprep.subr.mxu0 0.0
  %516 = vmatpush1.msra.mxu0 0.0
  %517 = vmatprep.subr.mxu0 0.0
  %518 = vmatpush1.msra.mxu0 0.0
  %519 = vmatprep.subr.mxu0 0.0
  %520 = vmatpush1.msra.mxu0 0.0
  %521 = vmatprep.subr.mxu0 0.0
  %522 = vmatpush1.msra.mxu0 0.0
  %523 = vmatprep.subr.mxu0 0.0
  %524 = vmatpush1.msra.mxu0 0.0
  %525 = vmatprep.subr.mxu0 0.0
  %526 = vmatpush1.msra.mxu0 0.0
  %527 = vmatprep.subr.mxu0 0.0
  %528 = vmatpush1.msra.mxu0 0.0
  %529 = vmatprep.subr.mxu0 0.0
  %530 = vmatpush1.msra.mxu0 0.0
  %531 = vmatprep.subr.mxu0 0.0
  %532 = vmatpush1.msra.mxu0 0.0
  %533 = vmatprep.subr.mxu0 0.0
  %534 = vmatpush1.msra.mxu0 0.0
  %535 = vmatprep.subr.mxu0 0.0
  %536 = vmatpush1.msra.mxu0 0.0
  %537 = vmatprep.subr.mxu0 0.0
  %538 = vmatpush1.msra.mxu0 0.0
  %539 = vmatprep.subr.mxu0 0.0
  %540 = vmatpush1.msra.mxu0 0.0
  %541 = vmatprep.subr.mxu0 0.0
  %542 = vmatpush1.msra.mxu0 0.0
  %543 = vmatprep.subr.mxu0 0.0
  %544 = vmatpush1.msra.mxu0 0.0
  %545 = vmatprep.subr.mxu0 0.0
  %546 = vmatpush1.msra.mxu0 0.0
  %547 = vmatprep.subr.mxu0 0.0
  %548 = vmatpush1.msra.mxu0 0.0
  %549 = vmatprep.subr.mxu0 0.0
  %550 = vmatpush1.msra.mxu0 0.0
  %551 = vmatprep.subr.mxu0 0.0
  %552 = vmatpush1.msra.mxu0 0.0
  %553 = vmatprep.subr.mxu0 0.0
  %554 = vmatpush1.msra.mxu0 0.0
  %555 = vmatprep.subr.mxu0 0.0
  %556 = vmatpush1.msra.mxu0 0.0
  %557 = vmatprep.mubr.f32.mxu0 0.0
  %558 = vmatmul.mubr.f32.gmra.mrb[0].mxu0 %v491
  %v559 = vpop.f32.mrb[0].mxu0
  %v560 = vadd.f32 %v487, %v559
  %v561 = vpop.f32.mrb[0].mxu0
  %562 = vdwg.mxu0
  %v564 = vrot.slane %v560, 1
  %v565 = vrot.slane %v560, 2
  %v568 = vadd.f32 %v140, %v564
  %v569 = vadd.f32 %v145, %v565
  %v572 = vrot.slane %v569, 7
  %vm575 = vcmask 261127
  %v576 = vsel %vm575, %v568, 0.0
  %577 = vadd.xlane.f32.xlu0 %v576
  %v578 = vpop.xlane.xlu0 %577
  %vm579 = vcmask 253952
  %v580 = vsel %vm579, %v572, 0.0
  %581 = vadd.xlane.f32.xlu0 %v580
  %v582 = vpop.xlane.xlu0 %581
  %v583 = vrcp.pop 32.0
  %v584 = vmul.f32 %v578, %v583
  %v585 = vmul.f32 %v582, %v583
  %v588 = vrot.slane %v585, 1
  %v591 = vsub.f32 %v568, %v584
  %v592 = vsub.f32 %v569, %v588
  %v593 = vmul.f32 %v591, %v591
  %v594 = vmul.f32 %v592, %v592
  %v597 = vrot.slane %v594, 7
  %v600 = vsel %vm575, %v593, 0.0
  %601 = vadd.xlane.f32.xlu0 %v600
  %v602 = vpop.xlane.xlu0 %601
  %v603 = vsel %vm579, %v597, 0.0
  %604 = vadd.xlane.f32.xlu0 %v603
  %v605 = vpop.xlane.xlu0 %604
  %v606 = vmul.f32 %v602, %v583
  %v607 = vmul.f32 %v605, %v583
  %v608 = vadd.f32 %v606, 1e-05
  %v609 = vadd.f32 %v607, 1e-05
  %v610 = vrsqrt.pop %v608
  %v611 = vrsqrt.pop %v609
  %v614 = vrot.slane %v611, 1
  %v617 = vmul.f32 %v591, %v610
  %v618 = vmul.f32 %v592, %v614
  %v619 = vlaneseq
  %v620 = vshrl.u32 %v619, 7
  %v621 = vsub.s32 5, %v620
  %v622 = vrot.slane %v58, %v621
  %v623 = vmul.f32 %v617, %v622
  %v624 = vmul.f32 %v618, %v622
  %v625 = vlaneseq
  %v626 = vshrl.u32 %v625, 7
  %v627 = vsub.s32 6, %v626
  %v628 = vrot.slane %v58, %v627
  %v629 = vadd.f32 %v623, %v628
  %v630 = vadd.f32 %v624, %v628
  %v631 = vlaneseq
  %v632 = vshrl.u32 %v631, 7
  %v633 = vsub.s32 0, %v632
  %v634 = vrot.slane %v57, %v633
  %v637 = vrot.slane %v629, 7
  %v638 = vrot.slane %v630, 6
  %v639 = vsel %vm318, %v638, %v637
  %v640 = vsel %vm66, %v639, 0
  %642 = vmatprep.subr.mxu0 0.0
  %643 = vmatpush1.msra.mxu0 %v53
  %644 = vmatprep.subr.mxu0 0.0
  %645 = vmatpush1.msra.mxu0 %v54
  %646 = vmatprep.subr.mxu0 0.0
  %647 = vmatpush1.msra.mxu0 %v55
  %648 = vmatprep.subr.mxu0 0.0
  %649 = vmatpush1.msra.mxu0 %v56
  %650 = vmatprep.subr.mxu0 0.0
  %651 = vmatpush1.msra.mxu0 0.0
  %652 = vmatprep.subr.mxu0 0.0
  %653 = vmatpush1.msra.mxu0 0.0
  %654 = vmatprep.subr.mxu0 0.0
  %655 = vmatpush1.msra.mxu0 0.0
  %656 = vmatprep.subr.mxu0 0.0
  %657 = vmatpush1.msra.mxu0 0.0
  %658 = vmatprep.subr.mxu0 0.0
  %659 = vmatpush1.msra.mxu0 0.0
  %660 = vmatprep.subr.mxu0 0.0
  %661 = vmatpush1.msra.mxu0 0.0
  %662 = vmatprep.subr.mxu0 0.0
  %663 = vmatpush1.msra.mxu0 0.0
  %664 = vmatprep.subr.mxu0 0.0
  %665 = vmatpush1.msra.mxu0 0.0
  %666 = vmatprep.subr.mxu0 0.0
  %667 = vmatpush1.msra.mxu0 0.0
  %668 = vmatprep.subr.mxu0 0.0
  %669 = vmatpush1.msra.mxu0 0.0
  %670 = vmatprep.subr.mxu0 0.0
  %671 = vmatpush1.msra.mxu0 0.0
  %672 = vmatprep.subr.mxu0 0.0
  %673 = vmatpush1.msra.mxu0 0.0
  %674 = vmatprep.subr.mxu0 0.0
  %675 = vmatpush1.msra.mxu0 0.0
  %676 = vmatprep.subr.mxu0 0.0
  %677 = vmatpush1.msra.mxu0 0.0
  %678 = vmatprep.subr.mxu0 0.0
  %679 = vmatpush1.msra.mxu0 0.0
  %680 = vmatprep.subr.mxu0 0.0
  %681 = vmatpush1.msra.mxu0 0.0
  %682 = vmatprep.subr.mxu0 0.0
  %683 = vmatpush1.msra.mxu0 0.0
  %684 = vmatprep.subr.mxu0 0.0
  %685 = vmatpush1.msra.mxu0 0.0
  %686 = vmatprep.subr.mxu0 0.0
  %687 = vmatpush1.msra.mxu0 0.0
  %688 = vmatprep.subr.mxu0 0.0
  %689 = vmatpush1.msra.mxu0 0.0
  %690 = vmatprep.subr.mxu0 0.0
  %691 = vmatpush1.msra.mxu0 0.0
  %692 = vmatprep.subr.mxu0 0.0
  %693 = vmatpush1.msra.mxu0 0.0
  %694 = vmatprep.subr.mxu0 0.0
  %695 = vmatpush1.msra.mxu0 0.0
  %696 = vmatprep.subr.mxu0 0.0
  %697 = vmatpush1.msra.mxu0 0.0
  %698 = vmatprep.subr.mxu0 0.0
  %699 = vmatpush1.msra.mxu0 0.0
  %700 = vmatprep.subr.mxu0 0.0
  %701 = vmatpush1.msra.mxu0 0.0
  %702 = vmatprep.subr.mxu0 0.0
  %703 = vmatpush1.msra.mxu0 0.0
  %704 = vmatprep.subr.mxu0 0.0
  %705 = vmatpush1.msra.mxu0 0.0
  %706 = vmatprep.mubr.f32.mxu0 0.0
  %707 = vmatmul.mubr.f32.gmra.mrb[0].mxu0 %v640
  %v708 = vpop.f32.mrb[0].mxu0
  %v709 = vadd.f32 %v634, %v708
  %v710 = vpop.f32.mrb[0].mxu0
  %711 = vdwg.mxu0
  %v712 = vmax.f32 %v709, 0.0
  %v713 = vlaneseq
  %v714 = vshrl.u32 %v713, 7
  %v715 = vsub.s32 7, %v714
  %v716 = vrot.slane %v58, %v715
  %717 = vmatprep.subr.mxu0 0.0
  %718 = vmatpush1.msra.mxu0 %v37
  %719 = vmatprep.subr.mxu0 0.0
  %720 = vmatpush1.msra.mxu0 %v38
  %721 = vmatprep.subr.mxu0 0.0
  %722 = vmatpush1.msra.mxu0 %v39
  %723 = vmatprep.subr.mxu0 0.0
  %724 = vmatpush1.msra.mxu0 %v40
  %725 = vmatprep.subr.mxu0 0.0
  %726 = vmatpush1.msra.mxu0 %v41
  %727 = vmatprep.subr.mxu0 0.0
  %728 = vmatpush1.msra.mxu0 %v42
  %729 = vmatprep.subr.mxu0 0.0
  %730 = vmatpush1.msra.mxu0 %v43
  %731 = vmatprep.subr.mxu0 0.0
  %732 = vmatpush1.msra.mxu0 %v44
  %733 = vmatprep.subr.mxu0 0.0
  %734 = vmatpush1.msra.mxu0 %v45
  %735 = vmatprep.subr.mxu0 0.0
  %736 = vmatpush1.msra.mxu0 %v46
  %737 = vmatprep.subr.mxu0 0.0
  %738 = vmatpush1.msra.mxu0 %v47
  %739 = vmatprep.subr.mxu0 0.0
  %740 = vmatpush1.msra.mxu0 %v48
  %741 = vmatprep.subr.mxu0 0.0
  %742 = vmatpush1.msra.mxu0 %v49
  %743 = vmatprep.subr.mxu0 0.0
  %744 = vmatpush1.msra.mxu0 %v50
  %745 = vmatprep.subr.mxu0 0.0
  %746 = vmatpush1.msra.mxu0 %v51
  %747 = vmatprep.subr.mxu0 0.0
  %748 = vmatpush1.msra.mxu0 %v52
  %749 = vmatprep.subr.mxu0 0.0
  %750 = vmatpush1.msra.mxu0 0.0
  %751 = vmatprep.subr.mxu0 0.0
  %752 = vmatpush1.msra.mxu0 0.0
  %753 = vmatprep.subr.mxu0 0.0
  %754 = vmatpush1.msra.mxu0 0.0
  %755 = vmatprep.subr.mxu0 0.0
  %756 = vmatpush1.msra.mxu0 0.0
  %757 = vmatprep.subr.mxu0 0.0
  %758 = vmatpush1.msra.mxu0 0.0
  %759 = vmatprep.subr.mxu0 0.0
  %760 = vmatpush1.msra.mxu0 0.0
  %761 = vmatprep.subr.mxu0 0.0
  %762 = vmatpush1.msra.mxu0 0.0
  %763 = vmatprep.subr.mxu0 0.0
  %764 = vmatpush1.msra.mxu0 0.0
  %765 = vmatprep.subr.mxu0 0.0
  %766 = vmatpush1.msra.mxu0 0.0
  %767 = vmatprep.subr.mxu0 0.0
  %768 = vmatpush1.msra.mxu0 0.0
  %769 = vmatprep.subr.mxu0 0.0
  %770 = vmatpush1.msra.mxu0 0.0
  %771 = vmatprep.subr.mxu0 0.0
  %772 = vmatpush1.msra.mxu0 0.0
  %773 = vmatprep.subr.mxu0 0.0
  %774 = vmatpush1.msra.mxu0 0.0
  %775 = vmatprep.subr.mxu0 0.0
  %776 = vmatpush1.msra.mxu0 0.0
  %777 = vmatprep.subr.mxu0 0.0
  %778 = vmatpush1.msra.mxu0 0.0
  %779 = vmatprep.subr.mxu0 0.0
  %780 = vmatpush1.msra.mxu0 0.0
  %781 = vmatprep.mubr.f32.mxu0 0.0
  %782 = vmatmul.mubr.f32.gmra.mrb[0].mxu0 %v712
  %v783 = vpop.f32.mrb[0].mxu0
  %v784 = vadd.f32 %v716, %v783
  %v785 = vpop.f32.mrb[0].mxu0
  %786 = vdwg.mxu0
  %v788 = vrot.slane %v784, 1
  %v789 = vrot.slane %v784, 2
  %v792 = vadd.f32 %v629, %v788
  %v793 = vadd.f32 %v630, %v789
  %v796 = vrot.slane %v793, 7
  %v799 = vsel %vm575, %v792, 0.0
  %800 = vadd.xlane.f32.xlu0 %v799
  %v801 = vpop.xlane.xlu0 %800
  %v802 = vsel %vm579, %v796, 0.0
  %803 = vadd.xlane.f32.xlu0 %v802
  %v804 = vpop.xlane.xlu0 %803
  %v805 = vmul.f32 %v801, %v583
  %v806 = vmul.f32 %v804, %v583
  %v809 = vrot.slane %v806, 1
  %v812 = vsub.f32 %v792, %v805
  %v813 = vsub.f32 %v793, %v809
  %v814 = vmul.f32 %v812, %v812
  %v815 = vmul.f32 %v813, %v813
  %v818 = vrot.slane %v815, 7
  %v821 = vsel %vm575, %v814, 0.0
  %822 = vadd.xlane.f32.xlu0 %v821
  %v823 = vpop.xlane.xlu0 %822
  %v824 = vsel %vm579, %v818, 0.0
  %825 = vadd.xlane.f32.xlu0 %v824
  %v826 = vpop.xlane.xlu0 %825
  %v827 = vmul.f32 %v823, %v583
  %v828 = vmul.f32 %v826, %v583
  %v829 = vadd.f32 %v827, 1e-05
  %v830 = vadd.f32 %v828, 1e-05
  %v831 = vrsqrt.pop %v829
  %v832 = vrsqrt.pop %v830
  %v835 = vrot.slane %v832, 1
  %v838 = vmul.f32 %v812, %v831
  %v839 = vmul.f32 %v813, %v835
  %v840 = vlaneseq
  %v841 = vshrl.u32 %v840, 7
  %v842 = vsub.s32 0, %v841
  %v843 = vrot.slane %v59, %v842
  %v844 = vmul.f32 %v838, %v843
  %v845 = vmul.f32 %v839, %v843
  %v846 = vlaneseq
  %v847 = vshrl.u32 %v846, 7
  %v848 = vsub.s32 1, %v847
  %v849 = vrot.slane %v59, %v848
  %v850 = vadd.f32 %v844, %v849
  %v851 = vadd.f32 %v845, %v849
  %v852 = vlaneseq
  %v853 = vshrl.u32 %v852, 7
  %v854 = vsub.s32 2, %v853
  %v855 = vrot.slane %v59, %v854
  %v856 = vmul.f32 %v850, %v855
  %v857 = vmul.f32 %v851, %v855
  %v860 = vrot.slane %v857, 7
  %v863 = vsel %vm575, %v856, 0.0
  %864 = vadd.xlane.f32.xlu0 %v863
  %v865 = vpop.xlane.xlu0 %864
  %v866 = vsel %vm579, %v860, 0.0
  %867 = vadd.xlane.f32.xlu0 %v866
  %v868 = vpop.xlane.xlu0 %867
  %v869 = vlaneseq
  %v870 = vshrl.u32 %v869, 7
  %v871 = vsub.s32 3, %v870
  %v872 = vrot.slane %v59, %v871
  %v873 = vadd.f32 %v865, %v872
  %v874 = vadd.f32 %v868, %v872
  %vm875 = vcmask 7175
  %876 = vst.msk [vmem:[%s4 - $0x7] sm:$0x80] %vm875, %v873
  %vm877 = vcmask 0
  %878 = vst.msk [vmem:[%s4 + $0x1] sm:$0x1] %vm877, %v874
  // Predicated region
  $region18: #{transformer_forward.1} parent=0 // pred_check
    _
  $region19: #{transformer_forward.1} parent=0 // pred_check_branch
    %880 = sbr.rel (0) target = $region21
  $region20: #{transformer_forward.1} parent=0 // pred_region
    _
  $region21: #{transformer_forward.1} parent=0 // pred_fallthru
    _
  // Predicated region
  $region22: #{transformer_forward.1} parent=0 // pred_check
    _
  $region23: #{transformer_forward.1} parent=0 // pred_check_branch
    %882 = sbr.rel (0) target = $region25
  $region24: #{transformer_forward.1} parent=0 // pred_region
    _
  $region25: #{transformer_forward.1} parent=0 // pred_fallthru
    _

</llo_original>
